<compile_context>
chip_gen: v6e
topology: v6e:2x2x1
jax: 0.10.0
libtpu: 0.0.40
codegen_flags: <defaults>
</compile_context>

<pallas_src>
import jax
import jax.numpy as jnp
from jax.experimental import pallas as pl
from jax.experimental.pallas import tpu as pltpu


def _round_up(n, m):
    return ((n + m - 1) // m) * m


def prepare_params(params):
    """Fuse + zero-pad the PyTorch-style parameters once (lane dims -> x128), bf16 weights."""
    emb = params["embedding"]                     # (V, E)
    V, E = emb.shape
    H = params["w_hh_t"].shape[0]
    Vp = max(_round_up(V, 128), 128)
    Ep = max(_round_up(E, 128), 128)
    Hp = max(_round_up(H, 128), 128)

    def pad2(a, shape, dtype):
        out = jnp.zeros(shape, dtype)
        return out.at[:a.shape[0], :a.shape[1]].set(a.astype(dtype))

    wih_p = pad2(params["w_ih_t"], (Ep, Hp), jnp.bfloat16)
    whh_p = pad2(params["w_hh_t"], (Hp, Hp), jnp.bfloat16)
    prepared = {
        "emb":  pad2(emb, (Vp, Ep), jnp.bfloat16),                              # (Vp, Ep)
        "wcat": jnp.concatenate([wih_p, whh_p], axis=0),                        # (Ep+Hp, Hp)
        "bcat": pad2(params["b_ih"] + params["b_hh"], (1, Hp), jnp.float32),    # (1, Hp)
        "wout": pad2(params["w_out_t"], (Hp, Vp), jnp.bfloat16),                # (Hp, Vp)
        "bout": pad2(params["b_out"], (1, Vp), jnp.float32),                    # (1, Vp)
    }
    dims = (V, E, H, Vp, Ep, Hp)
    return prepared, dims


def decoder_rnn_decode(tokens, hidden, prepared, dims, chunk_rows=256):
    """Run T teacher-forced decode steps inside one pallas_call.

    tokens: (T, B) int32; hidden: (1, B, H) f32.
    Returns logits (T, B, V) f32 and final hidden (1, B, H) f32.
    """
    V, E, H, Vp, Ep, Hp = dims
    T, B = tokens.shape
    Bp = max(_round_up(B, 8), 8)

    # Time chunk: target Tc*Bp ~= 256 rows (full M-width on v6e/v7x MXU; >=128 on v5e).
    Tc = max(1, min(chunk_rows // Bp, T))
    NC = pl.cdiv(T, Tc)
    Tpad = NC * Tc
    M = Tc * Bp                                   # rows per chunk for batched matmuls

    ids = jnp.zeros((Tpad, Bp), jnp.int32).at[:T, :B].set(tokens.astype(jnp.int32))
    ids = ids.reshape(NC, M, 1)
    h0 = jnp.zeros((Bp, Hp), jnp.float32).at[:B, :H].set(hidden[0].astype(jnp.float32))

    def kernel(ids_ref, h0_ref, emb_ref, wcat_ref, bcat_ref, wout_ref, bout_ref,
               logits_ref, hout_ref, xh_ref, x_ref, hacc_ref):
        c = pl.program_id(0)

        # Initialize the recurrent part of the [x | h] slab once.
        @pl.when(c == 0)
        def _init():
            xh_ref[:, Ep:] = h0_ref[...]

        # ---- Chunk-batched embedding gather: one M x Vp one-hot matmul per chunk. ----
        onehot = (ids_ref[0] ==
                  jax.lax.broadcasted_iota(jnp.int32, (M, Vp), 1)).astype(jnp.bfloat16)
        x_ref[...] = jnp.dot(onehot, emb_ref[...],
                             preferred_element_type=jnp.float32).astype(jnp.bfloat16)
        # Dropout(p=0.0) is the identity.

        # ---- Sequential Elman recurrence over the Tc steps of this chunk. ----
        def step(i, carry):
            row = pl.multiple_of(i * Bp, Bp)
            xh_ref[:, :Ep] = x_ref[pl.ds(row, Bp), :].astype(jnp.float32)
            h_new = jnp.tanh(
                jnp.dot(xh_ref[...].astype(jnp.bfloat16), wcat_ref[...],
                        preferred_element_type=jnp.float32) + bcat_ref[...])
            hacc_ref[pl.ds(row, Bp), :] = h_new.astype(jnp.bfloat16)
            if Tpad == T:
                xh_ref[:, Ep:] = h_new                       # always a real step
            else:
                @pl.when(c * Tc + i < T)                     # don't commit padded steps
                def _commit():
                    xh_ref[:, Ep:] = h_new
            return carry

        jax.lax.fori_loop(0, Tc, step, 0, unroll=True)

        # ---- Chunk-batched output projection: M = Tc*Bp rows in one matmul. ----
        logits_ref[0] = (jnp.dot(hacc_ref[...], wout_ref[...],
                                 preferred_element_type=jnp.float32)
                         + bout_ref[...]).astype(logits_ref.dtype)

        @pl.when(c == pl.num_programs(0) - 1)
        def _final():
            hout_ref[...] = xh_ref[:, Ep:]

    logits_p, h_p = pl.pallas_call(
        kernel,
        out_shape=(
            jax.ShapeDtypeStruct((NC, M, Vp), jnp.float32),
            jax.ShapeDtypeStruct((Bp, Hp), jnp.float32),
        ),
        grid_spec=pltpu.PrefetchScalarGridSpec(
            num_scalar_prefetch=0,
            grid=(NC,),
            in_specs=[
                pl.BlockSpec((1, M, 1), lambda c: (c, 0, 0)),       # token ids, per chunk
                pl.BlockSpec((Bp, Hp), lambda c: (0, 0)),           # h0 (read at c==0)
                pl.BlockSpec((Vp, Ep), lambda c: (0, 0)),           # embedding table (bf16)
                pl.BlockSpec((Ep + Hp, Hp), lambda c: (0, 0)),      # [W_ih^T ; W_hh^T] (bf16)
                pl.BlockSpec((1, Hp), lambda c: (0, 0)),            # b_ih + b_hh (f32)
                pl.BlockSpec((Hp, Vp), lambda c: (0, 0)),           # W_out^T (bf16)
                pl.BlockSpec((1, Vp), lambda c: (0, 0)),            # b_out (f32)
            ],
            out_specs=(
                pl.BlockSpec((1, M, Vp), lambda c: (c, 0, 0)),      # per-chunk logits
                pl.BlockSpec((Bp, Hp), lambda c: (0, 0)),           # final hidden
            ),
            scratch_shapes=[
                pltpu.VMEM((Bp, Ep + Hp), jnp.float32),             # persistent [x | h] slab
                pltpu.VMEM((M, Ep), jnp.bfloat16),                  # gathered embeddings
                pltpu.VMEM((M, Hp), jnp.bfloat16),                  # chunk hidden accumulator
            ],
        ),
        compiler_params=pltpu.CompilerParams(
            dimension_semantics=("arbitrary",)),                    # sequential time carry
    )(ids, h0, prepared["emb"], prepared["wcat"], prepared["bcat"],
      prepared["wout"], prepared["bout"])

    logits = logits_p.reshape(Tpad, Bp, Vp)[:T, :B, :V]
    return logits, h_p[None, :B, :H]


def decoder_rnn_forward(input_char, hidden, prepared, dims):
    """Exact DecoderRNN.forward semantics: one step, (B,) ids + (1,B,H) hidden."""
    logits_seq, h_new = decoder_rnn_decode(input_char[None, :], hidden, prepared, dims)
    return logits_seq[0], h_new


def init_params(key, output_size, embed_size, hidden_size):
    ks = jax.random.split(key, 7)
    scale = 0.1
    return {
        "embedding": scale * jax.random.normal(ks[0], (output_size, embed_size), jnp.float32),
        # Stored pre-transposed relative to PyTorch's (H, E)/(H, H)/(V, H).
        "w_ih_t":   scale * jax.random.normal(ks[1], (embed_size, hidden_size), jnp.float32),
        "w_hh_t":   scale * jax.random.normal(ks[2], (hidden_size, hidden_size), jnp.float32),
        "b_ih":     scale * jax.random.normal(ks[3], (1, hidden_size), jnp.float32),
        "b_hh":     scale * jax.random.normal(ks[4], (1, hidden_size), jnp.float32),
        "w_out_t":  scale * jax.random.normal(ks[5], (hidden_size, output_size), jnp.float32),
        "b_out":    scale * jax.random.normal(ks[6], (1, output_size), jnp.float32),
    }


if __name__ == "__main__":
    B = 8            # batch
    V = 16           # output_size (vocab)
    E = 32           # embed_size
    H = 32           # hidden_size
    T = 20           # decode steps for the fused-loop test

    key = jax.random.PRNGKey(0)
    k_param, k_in, k_h, k_seq = jax.random.split(key, 4)

    params = init_params(k_param, V, E, H)
    prepared, dims = prepare_params(params)

    input_char = jax.random.randint(k_in, (B,), 0, V, dtype=jnp.int32)
    hidden0 = 0.1 * jax.random.normal(k_h, (1, B, H), jnp.float32)

    # Pure-JAX reference; weights rounded to bf16 (kernel weight storage), math in f32.
    def bf16r(a):
        return a.astype(jnp.bfloat16).astype(jnp.float32)

    emb_q, wih_q, whh_q, wout_q = (bf16r(params[k]) for k in
                                   ("embedding", "w_ih_t", "w_hh_t", "w_out_t"))

    def ref_step(ic, h):
        x = jnp.take(emb_q, ic, axis=0)
        h_new = jnp.tanh(x @ wih_q + h @ whh_q + params["b_ih"] + params["b_hh"])
        return h_new @ wout_q + params["b_out"], h_new

    TOL = dict(atol=2e-2, rtol=2e-2)

    # --- Single step (exact module.forward semantics) ---
    step_fn = jax.jit(lambda ic, h: decoder_rnn_forward(ic, h, prepared, dims))
    logits, hidden1 = step_fn(input_char, hidden0)
    jax.block_until_ready((logits, hidden1))

    logits_ref, h_ref = ref_step(input_char, hidden0[0])
    assert logits.shape == (B, V) and hidden1.shape == (1, B, H)
    assert jnp.allclose(logits, logits_ref, **TOL), "logits mismatch"
    assert jnp.allclose(hidden1[0], h_ref, **TOL), "hidden mismatch"

    # --- T teacher-forced steps, whole loop fused inside one pallas_call ---
    tokens = jax.random.randint(k_seq, (T, B), 0, V, dtype=jnp.int32)

    def check_decode(chunk_rows):
        fn = jax.jit(lambda tk, h: decoder_rnn_decode(tk, h, prepared, dims,
                                                      chunk_rows=chunk_rows))
        logits_seq, hidden_T = fn(tokens, hidden0)
        jax.block_until_ready((logits_seq, hidden_T))
        h = hidden0[0]
        for t in range(T):
            l_ref, h = ref_step(tokens[t], h)
            assert jnp.allclose(logits_seq[t], l_ref, **TOL), f"step {t} logits mismatch"
        assert jnp.allclose(hidden_T[0], h, **TOL), "final hidden mismatch"

    check_decode(chunk_rows=256)   # single chunk (Tc = T)
    check_decode(chunk_rows=64)    # multiple chunks + padded trailing steps (Tc = 8, NC = 3)

    print("KERNEL_OK")
</pallas_src>

<mosaic_0001>
module attributes {stable_mosaic.version = 11 : i64} {
  func.func @kernel(%arg0: i32, %arg1: memref<1x8x1xi32, #tpu.memory_space<vmem>>, %arg2: memref<8x128xf32, #tpu.memory_space<vmem>>, %arg3: memref<128x128xbf16, #tpu.memory_space<vmem>>, %arg4: memref<256x128xbf16, #tpu.memory_space<vmem>>, %arg5: memref<1x128xf32, #tpu.memory_space<vmem>>, %arg6: memref<128x128xbf16, #tpu.memory_space<vmem>>, %arg7: memref<1x128xf32, #tpu.memory_space<vmem>>, %arg8: memref<1x8x128xf32, #tpu.memory_space<vmem>>, %arg9: memref<8x128xf32, #tpu.memory_space<vmem>>, %arg10: memref<8x256xf32, #tpu.memory_space<vmem>>, %arg11: memref<8x128xbf16, #tpu.memory_space<vmem>>, %arg12: memref<8x128xbf16, #tpu.memory_space<vmem>>) attributes {dimension_semantics = [#tpu.dimension_semantics<arbitrary>], iteration_bounds = array<i64: 1>, scalar_prefetch = 0 : i64, scratch_operands = 3 : i64, tpu.core_type = #tpu.core_type<tc>, window_params = [{transform_indices = @transform_0, window_bounds = array<i64: 1, 8, 1>}, {pipeline_mode = #tpu.pipeline_mode<synchronous>, transform_indices = @transform_1, window_bounds = array<i64: 8, 128>}, {pipeline_mode = #tpu.pipeline_mode<synchronous>, transform_indices = @transform_2, window_bounds = array<i64: 128, 128>}, {pipeline_mode = #tpu.pipeline_mode<synchronous>, transform_indices = @transform_3, window_bounds = array<i64: 256, 128>}, {pipeline_mode = #tpu.pipeline_mode<synchronous>, transform_indices = @transform_4, window_bounds = array<i64: 1, 128>}, {pipeline_mode = #tpu.pipeline_mode<synchronous>, transform_indices = @transform_5, window_bounds = array<i64: 128, 128>}, {pipeline_mode = #tpu.pipeline_mode<synchronous>, transform_indices = @transform_6, window_bounds = array<i64: 1, 128>}, {transform_indices = @transform_7, window_bounds = array<i64: 1, 8, 128>}, {pipeline_mode = #tpu.pipeline_mode<synchronous>, transform_indices = @transform_8, window_bounds = array<i64: 8, 128>}]} {
    %c0_i32 = arith.constant 0 : i32
    %0 = arith.cmpi eq, %arg0, %c0_i32 : i32
    %1 = arith.extui %0 : i1 to i32
    %c0_i32_0 = arith.constant 0 : i32
    %2 = arith.cmpi ne, %1, %c0_i32_0 : i32
    scf.if %2 {
      %c0_32 = arith.constant 0 : index
      %c0_33 = arith.constant 0 : index
      %45 = vector.load %arg2[%c0_32, %c0_33] : memref<8x128xf32, #tpu.memory_space<vmem>>, vector<8x128xf32>
      %c0_34 = arith.constant 0 : index
      %c128_35 = arith.constant 128 : index
      %46 = vector.load %arg10[%c0_34, %c128_35] : memref<8x256xf32, #tpu.memory_space<vmem>>, vector<8x128xf32>
      tpu.vector_store %arg10[%c0_34, %c128_35], %45 {strides = array<i32>} : memref<8x256xf32, #tpu.memory_space<vmem>>, vector<8x128xf32>,
    } else {
    }
    %c0 = arith.constant 0 : index
    %c0_1 = arith.constant 0 : index
    %c0_2 = arith.constant 0 : index
    %3 = vector.load %arg1[%c0, %c0_1, %c0_2] : memref<1x8x1xi32, #tpu.memory_space<vmem>>, vector<1x8x1xi32>
    %4 = vector.shape_cast %3 : vector<1x8x1xi32> to vector<8x1xi32>
    %5 = tpu.iota {dimensions = array<i32: 1>} : vector<8x128xi32>
    %6 = vector.broadcast %4 : vector<8x1xi32> to vector<8x128xi32>
    %7 = arith.cmpi eq, %6, %5 : vector<8x128xi32>
    %8 = arith.extui %7 : vector<8x128xi1> to vector<8x128xi32>
    %9 = arith.sitofp %8 : vector<8x128xi32> to vector<8x128xf32>
    %10 = arith.truncf %9 : vector<8x128xf32> to vector<8x128xbf16>
    %c0_3 = arith.constant 0 : index
    %c0_4 = arith.constant 0 : index
    %11 = vector.load %arg3[%c0_3, %c0_4] : memref<128x128xbf16, #tpu.memory_space<vmem>>, vector<128x128xbf16>
    %cst = arith.constant dense<0.000000e+00> : vector<8x128xf32>
    %12 = tpu.matmul %10, %11, %cst {dimension_numbers = #tpu.dot_dimension_numbers<[1], [0], [0], [1], [0, 0, 1, 1], [], []>} : vector<8x128xbf16>, vector<128x128xbf16>, vector<8x128xf32> -> vector<8x128xf32>
    %13 = arith.truncf %12 : vector<8x128xf32> to vector<8x128xbf16>
    %c0_5 = arith.constant 0 : index
    %c0_6 = arith.constant 0 : index
    %14 = vector.load %arg11[%c0_5, %c0_6] : memref<8x128xbf16, #tpu.memory_space<vmem>>, vector<8x128xbf16>
    tpu.vector_store %arg11[%c0_5, %c0_6], %13 {strides = array<i32>} : memref<8x128xbf16, #tpu.memory_space<vmem>>, vector<8x128xbf16>,
    %c0_i32_7 = arith.constant 0 : i32
    %c8_i32 = arith.constant 8 : i32
    %15 = arith.muli %c0_i32_7, %c8_i32 : i32
    %16 = tpu.assume_multiple %15, 8 : i32
    %17 = arith.index_cast %16 : i32 to index
    %c0_8 = arith.constant 0 : index
    %18 = vector.load %arg11[%17, %c0_8] : memref<8x128xbf16, #tpu.memory_space<vmem>>, vector<8x128xbf16>
    %19 = arith.extf %18 : vector<8x128xbf16> to vector<8x128xf32>
    %c0_9 = arith.constant 0 : index
    %c0_10 = arith.constant 0 : index
    %20 = vector.load %arg10[%c0_9, %c0_10] : memref<8x256xf32, #tpu.memory_space<vmem>>, vector<8x128xf32>
    tpu.vector_store %arg10[%c0_9, %c0_10], %19 {strides = array<i32>} : memref<8x256xf32, #tpu.memory_space<vmem>>, vector<8x128xf32>,
    %c0_11 = arith.constant 0 : index
    %c0_12 = arith.constant 0 : index
    %21 = vector.load %arg10[%c0_11, %c0_12] : memref<8x256xf32, #tpu.memory_space<vmem>>, vector<8x256xf32>
    %22 = arith.truncf %21 : vector<8x256xf32> to vector<8x256xbf16>
    %c0_13 = arith.constant 0 : index
    %c0_14 = arith.constant 0 : index
    %23 = vector.load %arg4[%c0_13, %c0_14] : memref<256x128xbf16, #tpu.memory_space<vmem>>, vector<256x128xbf16>
    %cst_15 = arith.constant dense<0.000000e+00> : vector<8x128xf32>
    %24 = tpu.matmul %22, %23, %cst_15 {dimension_numbers = #tpu.dot_dimension_numbers<[1], [0], [0], [1], [0, 0, 1, 1], [], []>} : vector<8x256xbf16>, vector<256x128xbf16>, vector<8x128xf32> -> vector<8x128xf32>
    %c0_16 = arith.constant 0 : index
    %c0_17 = arith.constant 0 : index
    %25 = vector.load %arg5[%c0_16, %c0_17] : memref<1x128xf32, #tpu.memory_space<vmem>>, vector<1x128xf32>
    %26 = vector.broadcast %25 : vector<1x128xf32> to vector<8x128xf32>
    %27 = arith.addf %24, %26 : vector<8x128xf32>
    %28 = math.tanh %27 : vector<8x128xf32>
    %29 = arith.truncf %28 : vector<8x128xf32> to vector<8x128xbf16>
    %30 = arith.index_cast %16 : i32 to index
    %c0_18 = arith.constant 0 : index
    %31 = vector.load %arg12[%30, %c0_18] : memref<8x128xbf16, #tpu.memory_space<vmem>>, vector<8x128xbf16>
    tpu.vector_store %arg12[%30, %c0_18], %29 {strides = array<i32>} : memref<8x128xbf16, #tpu.memory_space<vmem>>, vector<8x128xbf16>,
    %c0_19 = arith.constant 0 : index
    %c128 = arith.constant 128 : index
    %32 = vector.load %arg10[%c0_19, %c128] : memref<8x256xf32, #tpu.memory_space<vmem>>, vector<8x128xf32>
    tpu.vector_store %arg10[%c0_19, %c128], %28 {strides = array<i32>} : memref<8x256xf32, #tpu.memory_space<vmem>>, vector<8x128xf32>,
    %c1_i32 = arith.constant 1 : i32
    %c0_20 = arith.constant 0 : index
    %c0_21 = arith.constant 0 : index
    %33 = vector.load %arg12[%c0_20, %c0_21] : memref<8x128xbf16, #tpu.memory_space<vmem>>, vector<8x128xbf16>
    %c0_22 = arith.constant 0 : index
    %c0_23 = arith.constant 0 : index
    %34 = vector.load %arg6[%c0_22, %c0_23] : memref<128x128xbf16, #tpu.memory_space<vmem>>, vector<128x128xbf16>
    %cst_24 = arith.constant dense<0.000000e+00> : vector<8x128xf32>
    %35 = tpu.matmul %33, %34, %cst_24 {dimension_numbers = #tpu.dot_dimension_numbers<[1], [0], [0], [1], [0, 0, 1, 1], [], []>} : vector<8x128xbf16>, vector<128x128xbf16>, vector<8x128xf32> -> vector<8x128xf32>
    %c0_25 = arith.constant 0 : index
    %c0_26 = arith.constant 0 : index
    %36 = vector.load %arg7[%c0_25, %c0_26] : memref<1x128xf32, #tpu.memory_space<vmem>>, vector<1x128xf32>
    %37 = vector.broadcast %36 : vector<1x128xf32> to vector<8x128xf32>
    %38 = arith.addf %35, %37 : vector<8x128xf32>
    %c0_27 = arith.constant 0 : index
    %c0_28 = arith.constant 0 : index
    %c0_29 = arith.constant 0 : index
    %39 = vector.load %arg8[%c0_27, %c0_28, %c0_29] : memref<1x8x128xf32, #tpu.memory_space<vmem>>, vector<1x8x128xf32>
    %40 = vector.shape_cast %39 : vector<1x8x128xf32> to vector<8x128xf32>
    %41 = vector.shape_cast %38 : vector<8x128xf32> to vector<1x8x128xf32>
    tpu.vector_store %arg8[%c0_27, %c0_28, %c0_29], %41 {strides = array<i32>} : memref<1x8x128xf32, #tpu.memory_space<vmem>>, vector<1x8x128xf32>,
    %c0_i32_30 = arith.constant 0 : i32
    %42 = arith.cmpi eq, %arg0, %c0_i32_30 : i32
    %43 = arith.extui %42 : i1 to i32
    %c0_i32_31 = arith.constant 0 : i32
    %44 = arith.cmpi ne, %43, %c0_i32_31 : i32
    scf.if %44 {
      %c0_32 = arith.constant 0 : index
      %c128_33 = arith.constant 128 : index
      %45 = vector.load %arg10[%c0_32, %c128_33] : memref<8x256xf32, #tpu.memory_space<vmem>>, vector<8x128xf32>
      %c0_34 = arith.constant 0 : index
      %c0_35 = arith.constant 0 : index
      %46 = vector.load %arg9[%c0_34, %c0_35] : memref<8x128xf32, #tpu.memory_space<vmem>>, vector<8x128xf32>
      tpu.vector_store %arg9[%c0_34, %c0_35], %45 {strides = array<i32>} : memref<8x128xf32, #tpu.memory_space<vmem>>, vector<8x128xf32>,
    } else {
    }
    return
  }
  func.func @transform_0(%arg0: i32) -> (i32, i32, i32) {
    %c0_i32 = arith.constant 0 : i32
    %c0_i32_0 = arith.constant 0 : i32
    %c0_i32_1 = arith.constant 0 : i32
    return %arg0, %c0_i32, %c0_i32_0 : i32, i32, i32
  }
  func.func @transform_1(%arg0: i32) -> (i32, i32) {
    %c0_i32 = arith.constant 0 : i32
    %c0_i32_0 = arith.constant 0 : i32
    %c0_i32_1 = arith.constant 0 : i32
    return %c0_i32, %c0_i32_0 : i32, i32
  }
  func.func @transform_2(%arg0: i32) -> (i32, i32) {
    %c0_i32 = arith.constant 0 : i32
    %c0_i32_0 = arith.constant 0 : i32
    %c0_i32_1 = arith.constant 0 : i32
    return %c0_i32, %c0_i32_0 : i32, i32
  }
  func.func @transform_3(%arg0: i32) -> (i32, i32) {
    %c0_i32 = arith.constant 0 : i32
    %c0_i32_0 = arith.constant 0 : i32
    %c0_i32_1 = arith.constant 0 : i32
    return %c0_i32, %c0_i32_0 : i32, i32
  }
  func.func @transform_4(%arg0: i32) -> (i32, i32) {
    %c0_i32 = arith.constant 0 : i32
    %c0_i32_0 = arith.constant 0 : i32
    %c0_i32_1 = arith.constant 0 : i32
    return %c0_i32, %c0_i32_0 : i32, i32
  }
  func.func @transform_5(%arg0: i32) -> (i32, i32) {
    %c0_i32 = arith.constant 0 : i32
    %c0_i32_0 = arith.constant 0 : i32
    %c0_i32_1 = arith.constant 0 : i32
    return %c0_i32, %c0_i32_0 : i32, i32
  }
  func.func @transform_6(%arg0: i32) -> (i32, i32) {
    %c0_i32 = arith.constant 0 : i32
    %c0_i32_0 = arith.constant 0 : i32
    %c0_i32_1 = arith.constant 0 : i32
    return %c0_i32, %c0_i32_0 : i32, i32
  }
  func.func @transform_7(%arg0: i32) -> (i32, i32, i32) {
    %c0_i32 = arith.constant 0 : i32
    %c0_i32_0 = arith.constant 0 : i32
    %c0_i32_1 = arith.constant 0 : i32
    return %arg0, %c0_i32, %c0_i32_0 : i32, i32, i32
  }
  func.func @transform_8(%arg0: i32) -> (i32, i32) {
    %c0_i32 = arith.constant 0 : i32
    %c0_i32_0 = arith.constant 0 : i32
    %c0_i32_1 = arith.constant 0 : i32
    return %c0_i32, %c0_i32_0 : i32, i32
  }
}

</mosaic_0001>

<llo_original>
// kernel: _lambda_.1
$region0: #{_lambda_.1}
  #allocation0 [shape = 'u32[]', space=smem, size = 0x4, offset = 0x4, fixed_abs, tag = 'smem constant byte address 0x4 - core index']
  #allocation1 [shape = 'u32[144,128]{1,0:T(1,128)}', space=vmem, size = 0x12000, scoped, tag = 'internal scratch']
  #allocation2 [shape = 'f32[8,256]{1,0:T(8,128)}', space=vmem, size = 0x2000, scoped, tag = 'scratch operand']
  #allocation3 [shape = 'bf16[8,128]{1,0:T(8,128)(2,1)}', space=vmem, size = 0x800, scoped, tag = 'scratch operand']
  #allocation4 [shape = 'bf16[8,128]{1,0:T(8,128)(2,1)}', space=vmem, size = 0x800, scoped, tag = 'scratch operand']
  %s0 = inlined_call_operand.vmem [shape: s32[1,8,1], index: 0, kind: input, shape index: {}]
  %s1 = inlined_call_operand.vmem [shape: f32[8,128], index: 1, kind: input, shape index: {}]
  %s2 = inlined_call_operand.hbm [shape: bf16[128,128], index: 2, kind: input, shape index: {}]
  %s3 = inlined_call_operand.hbm [shape: bf16[256,128], index: 3, kind: input, shape index: {}]
  %s4 = inlined_call_operand.vmem [shape: f32[1,128], index: 4, kind: input, shape index: {}]
  %s5 = inlined_call_operand.hbm [shape: bf16[128,128], index: 5, kind: input, shape index: {}]
  %s6 = inlined_call_operand.vmem [shape: f32[1,128], index: 6, kind: input, shape index: {}]
  %s7 = inlined_call_operand.vmem [shape: f32[1,8,128], index: 7, kind: output, shape index: {0}]
  %s8 = inlined_call_operand.vmem [shape: f32[8,128], index: 8, kind: output, shape index: {1}]
  %9 = xla_tuple %s7, %s8
  %s10 = sld [smem:[#allocation0]]
  $region66: #{_lambda_.1} parent=0
    _
  %s12 = ssub.s32 1, %s10
  %s13 = scalar_select 0, %s12, %s10
  $region1: #{_lambda_.1} parent=0
    #allocation5 [shape = 'u8[32768]{0}', space=vmem, size = 0x8000, scoped, tag = 'input window, operand 2, single buffered']
    #allocation6 [shape = 's32[1]{0}', space=sflag, size = 0x4, scoped, tag = 'scoped memory for _lambda_.1']
    #allocation7 [shape = 'u8[65536]{0}', space=vmem, size = 0x10000, scoped, tag = 'input window, operand 3, single buffered']
    #allocation8 [shape = 's32[1]{0}', space=sflag, size = 0x4, scoped, tag = 'scoped memory for _lambda_.1']
    #allocation9 [shape = 'u8[32768]{0}', space=vmem, size = 0x8000, scoped, tag = 'input window, operand 5, single buffered']
    %14 = vsyncpa [#allocation6], 0
    %15 = vsyncpa [#allocation8], 0
    // Predicated region
    $region2: #{_lambda_.1} parent=1 // pred_check
      _
    $region3: #{_lambda_.1} parent=1 // pred_check_branch
      %17 = sbr.rel (0) target = $region5
    $region4: #{_lambda_.1} parent=1 // pred_region
      _
    $region5: #{_lambda_.1} parent=1 // pred_fallthru
      _
    // Predicated region
    $region6: #{_lambda_.1} parent=1 // pred_check
      _
    $region7: #{_lambda_.1} parent=1 // pred_check_branch
      %19 = sbr.rel (0) target = $region9
    $region8: #{_lambda_.1} parent=1 // pred_region
      _
    $region9: #{_lambda_.1} parent=1 // pred_fallthru
      _
    // Predicated region
    $region10: #{_lambda_.1} parent=1 // pred_check
      _
    $region11: #{_lambda_.1} parent=1 // pred_check_branch
      %21 = sbr.rel (0) target = $region13
    $region12: #{_lambda_.1} parent=1 // pred_region
      %s23 = ssub.s32 1024, 1024
      %24 = vsyncadd [#allocation6], %s23
      %s25 = sshll.u32 [#allocation5], 4
      %s26 = int_to_ptr.vmem [resolvable:$true] %s25
      %31 = dma.hbm_to_vmem [thread:$0]  %s2, 1024, %s26, [#allocation6], 64, 64, 4
    $region13: #{_lambda_.1} parent=1 // pred_fallthru
      _
    // Predicated region
    $region14: #{_lambda_.1} parent=1 // pred_check
      _
    $region15: #{_lambda_.1} parent=1 // pred_check_branch
      %33 = sbr.rel (0) target = $region17
    $region16: #{_lambda_.1} parent=1 // pred_region
      %s35 = ssub.s32 2048, 2048
      %36 = vsyncadd [#allocation8], %s35
      %s37 = sshll.u32 [#allocation7], 4
      %s38 = int_to_ptr.vmem [resolvable:$true] %s37
      %43 = dma.hbm_to_vmem [thread:$0]  %s3, 2048, %s38, [#allocation8], 64, 64, 4
    $region17: #{_lambda_.1} parent=1 // pred_fallthru
      _
    // Predicated region
    $region18: #{_lambda_.1} parent=1 // pred_check
      _
    $region19: #{_lambda_.1} parent=1 // pred_check_branch
      %45 = sbr.rel (0) target = $region21
    $region20: #{_lambda_.1} parent=1 // pred_region
      _
    $region21: #{_lambda_.1} parent=1 // pred_fallthru
      _
    // Predicated region
    $region22: #{_lambda_.1} parent=1 // pred_check
      _
    $region23: #{_lambda_.1} parent=1 // pred_check_branch
      %47 = sbr.rel (0) target = $region25
    $region24: #{_lambda_.1} parent=1 // pred_region
      %s49 = ssub.s32 1024, 1024
      %50 = vsyncadd [#allocation8], %s49
      %s51 = sshll.u32 [#allocation9], 4
      %s52 = int_to_ptr.vmem [resolvable:$true] %s51
      %57 = dma.hbm_to_vmem [thread:$0]  %s5, 1024, %s52, [#allocation8], 64, 64, 4
    $region25: #{_lambda_.1} parent=1 // pred_fallthru
      _
    // Predicated region
    $region26: #{_lambda_.1} parent=1 // pred_check
      _
    $region27: #{_lambda_.1} parent=1 // pred_check_branch
      %59 = sbr.rel (0) target = $region29
    $region28: #{_lambda_.1} parent=1 // pred_region
      _
    $region29: #{_lambda_.1} parent=1 // pred_fallthru
      _
    // Predicated region
    $region30: #{_lambda_.1} parent=1 // pred_check
      _
    $region31: #{_lambda_.1} parent=1 // pred_check_branch
      %61 = sbr.rel (0) target = $region33
    $region32: #{_lambda_.1} parent=1 // pred_region
      %62 = dma.done [#allocation6], 1024
    $region33: #{_lambda_.1} parent=1 // pred_fallthru
      _
    // Predicated region
    $region34: #{_lambda_.1} parent=1 // pred_check
      _
    $region35: #{_lambda_.1} parent=1 // pred_check_branch
      %64 = sbr.rel (0) target = $region37
    $region36: #{_lambda_.1} parent=1 // pred_region
      %65 = dma.done [#allocation8], 2048
    $region37: #{_lambda_.1} parent=1 // pred_fallthru
      _
    // Predicated region
    $region38: #{_lambda_.1} parent=1 // pred_check
      _
    $region39: #{_lambda_.1} parent=1 // pred_check_branch
      %67 = sbr.rel (0) target = $region41
    $region40: #{_lambda_.1} parent=1 // pred_region
      %68 = dma.done [#allocation8], 1024
    $region41: #{_lambda_.1} parent=1 // pred_fallthru
      _
    %p70 = scmp.eq.s32.totalorder 0, 0
    // Predicated region
    $region42: #{_lambda_.1} parent=1 // pred_check
      %p71 = pneg %p70
    $region43: #{_lambda_.1} parent=1 // pred_check_branch
      %73 = sbr.rel (%p71) target = $region45
    $region44: #{_lambda_.1} parent=1 // pred_region
      %v74 = vld [vmem:[%s1] sm:$0xff]
      %75 = vst [vmem:[#allocation2 + $0x8] sm:$0xff] %v74
    $region45: #{_lambda_.1} parent=1 // pred_fallthru
      _
    %v76 = vld [vmem:[%s0] sm:$0xff]
    %v77 = vlaneseq
    %v78 = vand.u32 %v77, 127
    %79 = vset.pattern.permute.xlu0 0
    %80 = vperm.xlu0 %79, %v76
    %v81 = vpop.permute.xlu0 %80
    %vm82 = vcmp.eq.s32.totalorder %v81, %v78
    %v83 = vsel %vm82, 1, 0
    %v84 = vcvt.s32.f32 %v83
    %v85 = vpack.c.bf16 %v84, %v84
    %v86 = vld [vmem:[#allocation5] sm:$0xf]
    %v87 = vld [vmem:[#allocation5 + $0x4] sm:$0xf]
    %v88 = vld [vmem:[#allocation5 + $0x8] sm:$0xf]
    %v89 = vld [vmem:[#allocation5 + $0xc] sm:$0xf]
    %v90 = vld [vmem:[#allocation5 + $0x10] sm:$0xf]
    %v91 = vld [vmem:[#allocation5 + $0x14] sm:$0xf]
    %v92 = vld [vmem:[#allocation5 + $0x18] sm:$0xf]
    %v93 = vld [vmem:[#allocation5 + $0x1c] sm:$0xf]
    %v94 = vld [vmem:[#allocation5 + $0x20] sm:$0xf]
    %v95 = vld [vmem:[#allocation5 + $0x24] sm:$0xf]
    %v96 = vld [vmem:[#allocation5 + $0x28] sm:$0xf]
    %v97 = vld [vmem:[#allocation5 + $0x2c] sm:$0xf]
    %v98 = vld [vmem:[#allocation5 + $0x30] sm:$0xf]
    %v99 = vld [vmem:[#allocation5 + $0x34] sm:$0xf]
    %v100 = vld [vmem:[#allocation5 + $0x38] sm:$0xf]
    %v101 = vld [vmem:[#allocation5 + $0x3c] sm:$0xf]
    %v118 = vunpack.c.l.b16 %v86
    %v119 = vunpack.c.l.b16 %v87
    %v120 = vunpack.c.l.b16 %v88
    %v121 = vunpack.c.l.b16 %v89
    %v122 = vunpack.c.l.b16 %v90
    %v123 = vunpack.c.l.b16 %v91
    %v124 = vunpack.c.l.b16 %v92
    %v125 = vunpack.c.l.b16 %v93
    %v126 = vunpack.c.l.b16 %v94
    %v127 = vunpack.c.l.b16 %v95
    %v128 = vunpack.c.l.b16 %v96
    %v129 = vunpack.c.l.b16 %v97
    %v130 = vunpack.c.l.b16 %v98
    %v131 = vunpack.c.l.b16 %v99
    %v132 = vunpack.c.l.b16 %v100
    %v133 = vunpack.c.l.b16 %v101
    %v134 = vpack.c.b16 %v119, %v118
    %v135 = vpack.c.b16 %v121, %v120
    %v136 = vpack.c.b16 %v123, %v122
    %v137 = vpack.c.b16 %v125, %v124
    %v138 = vpack.c.b16 %v127, %v126
    %v139 = vpack.c.b16 %v129, %v128
    %v140 = vpack.c.b16 %v131, %v130
    %v141 = vpack.c.b16 %v133, %v132
    %150 = vmatprep.subr.bf16.mxu0 0
    %151 = vmatpush1.bf16.msra.mxu0 %v141
    %152 = vmatprep.subr.bf16.mxu0 0
    %153 = vmatpush1.bf16.msra.mxu0 %v140
    %154 = vmatprep.subr.bf16.mxu0 0
    %155 = vmatpush1.bf16.msra.mxu0 %v139
    %156 = vmatprep.subr.bf16.mxu0 0
    %157 = vmatpush1.bf16.msra.mxu0 %v138
    %158 = vmatprep.subr.bf16.mxu0 0
    %159 = vmatpush1.bf16.msra.mxu0 %v137
    %160 = vmatprep.subr.bf16.mxu0 0
    %161 = vmatpush1.bf16.msra.mxu0 %v136
    %162 = vmatprep.subr.bf16.mxu0 0
    %163 = vmatpush1.bf16.msra.mxu0 %v135
    %164 = vmatprep.subr.bf16.mxu0 0
    %165 = vmatpush1.bf16.msra.mxu0 %v134
    %166 = vmatprep.subr.bf16.mxu0 0
    %167 = vmatpush2.bf16.msra.mxu0 0
    %168 = vmatprep.subr.bf16.mxu0 0
    %169 = vmatpush2.bf16.msra.mxu0 0
    %170 = vmatprep.subr.bf16.mxu0 0
    %171 = vmatpush2.bf16.msra.mxu0 0
    %172 = vmatprep.subr.bf16.mxu0 0
    %173 = vmatpush2.bf16.msra.mxu0 0
    %174 = vmatprep.subr.bf16.mxu0 0
    %175 = vmatpush2.bf16.msra.mxu0 0
    %176 = vmatprep.subr.bf16.mxu0 0
    %177 = vmatpush2.bf16.msra.mxu0 0
    %178 = vmatprep.subr.bf16.mxu0 0
    %179 = vmatpush2.bf16.msra.mxu0 0
    %180 = vmatprep.subr.bf16.mxu0 0
    %181 = vmatpush2.bf16.msra.mxu0 0
    %182 = vmatprep.mubr.bf16.mxu0 0
    %183 = vmatmul.mubr.bf16.gmra.mxu0 %v85
    %v184 = vpop.f32.mrf.mxu0
    %v185 = vadd.f32 0.0, %v184
    %v186 = vpop.f32.mrf.mxu0
    %v187 = vpop.f32.mrf.mxu0
    %v188 = vpop.f32.mrf.mxu0
    %189 = vdwg.mxu0
    %v190 = vpack.c.bf16 %v185, %v185
    %191 = vst [vmem:[#allocation3] sm:$0xf] %v190
    %v192 = vld [vmem:[#allocation3] sm:$0xf]
    %v193 = vunpack.c.l.bf16 %v192
    %194 = vst [vmem:[#allocation2] sm:$0xff] %v193
    %v195 = vld [vmem:[#allocation2] sm:$0xff]
    %v196 = vld [vmem:[#allocation2 + $0x8] sm:$0xff]
    %v197 = vpack.c.bf16 %v195, %v195
    %v198 = vpack.c.bf16 %v196, %v196
    %v199 = vld [vmem:[#allocation7] sm:$0xf]
    %v200 = vld [vmem:[#allocation7 + $0x4] sm:$0xf]
    %v201 = vld [vmem:[#allocation7 + $0x8] sm:$0xf]
    %v202 = vld [vmem:[#allocation7 + $0xc] sm:$0xf]
    %v203 = vld [vmem:[#allocation7 + $0x10] sm:$0xf]
    %v204 = vld [vmem:[#allocation7 + $0x14] sm:$0xf]
    %v205 = vld [vmem:[#allocation7 + $0x18] sm:$0xf]
    %v206 = vld [vmem:[#allocation7 + $0x1c] sm:$0xf]
    %v207 = vld [vmem:[#allocation7 + $0x20] sm:$0xf]
    %v208 = vld [vmem:[#allocation7 + $0x24] sm:$0xf]
    %v209 = vld [vmem:[#allocation7 + $0x28] sm:$0xf]
    %v210 = vld [vmem:[#allocation7 + $0x2c] sm:$0xf]
    %v211 = vld [vmem:[#allocation7 + $0x30] sm:$0xf]
    %v212 = vld [vmem:[#allocation7 + $0x34] sm:$0xf]
    %v213 = vld [vmem:[#allocation7 + $0x38] sm:$0xf]
    %v214 = vld [vmem:[#allocation7 + $0x3c] sm:$0xf]
    %v215 = vld [vmem:[#allocation7 + $0x40] sm:$0xf]
    %v216 = vld [vmem:[#allocation7 + $0x44] sm:$0xf]
    %v217 = vld [vmem:[#allocation7 + $0x48] sm:$0xf]
    %v218 = vld [vmem:[#allocation7 + $0x4c] sm:$0xf]
    %v219 = vld [vmem:[#allocation7 + $0x50] sm:$0xf]
    %v220 = vld [vmem:[#allocation7 + $0x54] sm:$0xf]
    %v221 = vld [vmem:[#allocation7 + $0x58] sm:$0xf]
    %v222 = vld [vmem:[#allocation7 + $0x5c] sm:$0xf]
    %v223 = vld [vmem:[#allocation7 + $0x60] sm:$0xf]
    %v224 = vld [vmem:[#allocation7 + $0x64] sm:$0xf]
    %v225 = vld [vmem:[#allocation7 + $0x68] sm:$0xf]
    %v226 = vld [vmem:[#allocation7 + $0x6c] sm:$0xf]
    %v227 = vld [vmem:[#allocation7 + $0x70] sm:$0xf]
    %v228 = vld [vmem:[#allocation7 + $0x74] sm:$0xf]
    %v229 = vld [vmem:[#allocation7 + $0x78] sm:$0xf]
    %v230 = vld [vmem:[#allocation7 + $0x7c] sm:$0xf]
    %v231 = vld [vmem:[%s4] sm:$0x1]
    %v233 = vlaneseq
    %v234 = vshrl.u32 %v233, 7
    %v235 = vsub.s32 0, %v234
    %v236 = vrot.slane %v231, %v235
    %v270 = vunpack.c.l.b16 %v199
    %v271 = vunpack.c.l.b16 %v200
    %v272 = vunpack.c.l.b16 %v201
    %v273 = vunpack.c.l.b16 %v202
    %v274 = vunpack.c.l.b16 %v203
    %v275 = vunpack.c.l.b16 %v204
    %v276 = vunpack.c.l.b16 %v205
    %v277 = vunpack.c.l.b16 %v206
    %v278 = vunpack.c.l.b16 %v207
    %v279 = vunpack.c.l.b16 %v208
    %v280 = vunpack.c.l.b16 %v209
    %v281 = vunpack.c.l.b16 %v210
    %v282 = vunpack.c.l.b16 %v211
    %v283 = vunpack.c.l.b16 %v212
    %v284 = vunpack.c.l.b16 %v213
    %v285 = vunpack.c.l.b16 %v214
    %v286 = vunpack.c.l.b16 %v215
    %v287 = vunpack.c.l.b16 %v216
    %v288 = vunpack.c.l.b16 %v217
    %v289 = vunpack.c.l.b16 %v218
    %v290 = vunpack.c.l.b16 %v219
    %v291 = vunpack.c.l.b16 %v220
    %v292 = vunpack.c.l.b16 %v221
    %v293 = vunpack.c.l.b16 %v222
    %v294 = vunpack.c.l.b16 %v223
    %v295 = vunpack.c.l.b16 %v224
    %v296 = vunpack.c.l.b16 %v225
    %v297 = vunpack.c.l.b16 %v226
    %v298 = vunpack.c.l.b16 %v227
    %v299 = vunpack.c.l.b16 %v228
    %v300 = vunpack.c.l.b16 %v229
    %v301 = vunpack.c.l.b16 %v230
    %v302 = vpack.c.b16 %v271, %v270
    %v303 = vpack.c.b16 %v273, %v272
    %v304 = vpack.c.b16 %v275, %v274
    %v305 = vpack.c.b16 %v277, %v276
    %v306 = vpack.c.b16 %v279, %v278
    %v307 = vpack.c.b16 %v281, %v280
    %v308 = vpack.c.b16 %v283, %v282
    %v309 = vpack.c.b16 %v285, %v284
    %v310 = vpack.c.b16 %v287, %v286
    %v311 = vpack.c.b16 %v289, %v288
    %v312 = vpack.c.b16 %v291, %v290
    %v313 = vpack.c.b16 %v293, %v292
    %v314 = vpack.c.b16 %v295, %v294
    %v315 = vpack.c.b16 %v297, %v296
    %v316 = vpack.c.b16 %v299, %v298
    %v317 = vpack.c.b16 %v301, %v300
    %334 = vmatprep.subr.bf16.mxu0 0
    %335 = vmatpush1.bf16.msra.mxu0 %v309
    %336 = vmatprep.subr.bf16.mxu0 0
    %337 = vmatpush1.bf16.msra.mxu0 %v308
    %338 = vmatprep.subr.bf16.mxu0 0
    %339 = vmatpush1.bf16.msra.mxu0 %v307
    %340 = vmatprep.subr.bf16.mxu0 0
    %341 = vmatpush1.bf16.msra.mxu0 %v306
    %342 = vmatprep.subr.bf16.mxu0 0
    %343 = vmatpush1.bf16.msra.mxu0 %v305
    %344 = vmatprep.subr.bf16.mxu0 0
    %345 = vmatpush1.bf16.msra.mxu0 %v304
    %346 = vmatprep.subr.bf16.mxu0 0
    %347 = vmatpush1.bf16.msra.mxu0 %v303
    %348 = vmatprep.subr.bf16.mxu0 0
    %349 = vmatpush1.bf16.msra.mxu0 %v302
    %350 = vmatprep.subr.bf16.mxu0 0
    %351 = vmatpush2.bf16.msra.mxu0 %v317
    %352 = vmatprep.subr.bf16.mxu0 0
    %353 = vmatpush2.bf16.msra.mxu0 %v316
    %354 = vmatprep.subr.bf16.mxu0 0
    %355 = vmatpush2.bf16.msra.mxu0 %v315
    %356 = vmatprep.subr.bf16.mxu0 0
    %357 = vmatpush2.bf16.msra.mxu0 %v314
    %358 = vmatprep.subr.bf16.mxu0 0
    %359 = vmatpush2.bf16.msra.mxu0 %v313
    %360 = vmatprep.subr.bf16.mxu0 0
    %361 = vmatpush2.bf16.msra.mxu0 %v312
    %362 = vmatprep.subr.bf16.mxu0 0
    %363 = vmatpush2.bf16.msra.mxu0 %v311
    %364 = vmatprep.subr.bf16.mxu0 0
    %365 = vmatpush2.bf16.msra.mxu0 %v310
    %366 = vmatprep.mubr.bf16.mxu0 %v198
    %367 = vmatmul.mubr.bf16.gmra.mxu0 %v197
    %v368 = vpop.f32.mrf.mxu0
    %v369 = vadd.f32 %v236, %v368
    %v370 = vpop.f32.mrf.mxu0
    %v371 = vpop.f32.mrf.mxu0
    %v372 = vpop.f32.mrf.mxu0
    %373 = vdwg.mxu0
    %v374 = vtanh.pop %v369
    %v375 = vpack.c.bf16 %v374, %v374
    %376 = vst [vmem:[#allocation4] sm:$0xf] %v375
    %377 = vst [vmem:[#allocation2 + $0x8] sm:$0xff] %v374
    %v378 = vld [vmem:[#allocation4] sm:$0xf]
    %v379 = vld [vmem:[#allocation9] sm:$0xf]
    %v380 = vld [vmem:[#allocation9 + $0x4] sm:$0xf]
    %v381 = vld [vmem:[#allocation9 + $0x8] sm:$0xf]
    %v382 = vld [vmem:[#allocation9 + $0xc] sm:$0xf]
    %v383 = vld [vmem:[#allocation9 + $0x10] sm:$0xf]
    %v384 = vld [vmem:[#allocation9 + $0x14] sm:$0xf]
    %v385 = vld [vmem:[#allocation9 + $0x18] sm:$0xf]
    %v386 = vld [vmem:[#allocation9 + $0x1c] sm:$0xf]
    %v387 = vld [vmem:[#allocation9 + $0x20] sm:$0xf]
    %v388 = vld [vmem:[#allocation9 + $0x24] sm:$0xf]
    %v389 = vld [vmem:[#allocation9 + $0x28] sm:$0xf]
    %v390 = vld [vmem:[#allocation9 + $0x2c] sm:$0xf]
    %v391 = vld [vmem:[#allocation9 + $0x30] sm:$0xf]
    %v392 = vld [vmem:[#allocation9 + $0x34] sm:$0xf]
    %v393 = vld [vmem:[#allocation9 + $0x38] sm:$0xf]
    %v394 = vld [vmem:[#allocation9 + $0x3c] sm:$0xf]
    %v395 = vld [vmem:[%s6] sm:$0x1]
    %v397 = vlaneseq
    %v398 = vshrl.u32 %v397, 7
    %v399 = vsub.s32 0, %v398
    %v400 = vrot.slane %v395, %v399
    %v418 = vunpack.c.l.b16 %v379
    %v419 = vunpack.c.l.b16 %v380
    %v420 = vunpack.c.l.b16 %v381
    %v421 = vunpack.c.l.b16 %v382
    %v422 = vunpack.c.l.b16 %v383
    %v423 = vunpack.c.l.b16 %v384
    %v424 = vunpack.c.l.b16 %v385
    %v425 = vunpack.c.l.b16 %v386
    %v426 = vunpack.c.l.b16 %v387
    %v427 = vunpack.c.l.b16 %v388
    %v428 = vunpack.c.l.b16 %v389
    %v429 = vunpack.c.l.b16 %v390
    %v430 = vunpack.c.l.b16 %v391
    %v431 = vunpack.c.l.b16 %v392
    %v432 = vunpack.c.l.b16 %v393
    %v433 = vunpack.c.l.b16 %v394
    %v434 = vpack.c.b16 %v419, %v418
    %v435 = vpack.c.b16 %v421, %v420
    %v436 = vpack.c.b16 %v423, %v422
    %v437 = vpack.c.b16 %v425, %v424
    %v438 = vpack.c.b16 %v427, %v426
    %v439 = vpack.c.b16 %v429, %v428
    %v440 = vpack.c.b16 %v431, %v430
    %v441 = vpack.c.b16 %v433, %v432
    %450 = vmatprep.subr.bf16.mxu0 0
    %451 = vmatpush1.bf16.msra.mxu0 %v441
    %452 = vmatprep.subr.bf16.mxu0 0
    %453 = vmatpush1.bf16.msra.mxu0 %v440
    %454 = vmatprep.subr.bf16.mxu0 0
    %455 = vmatpush1.bf16.msra.mxu0 %v439
    %456 = vmatprep.subr.bf16.mxu0 0
    %457 = vmatpush1.bf16.msra.mxu0 %v438
    %458 = vmatprep.subr.bf16.mxu0 0
    %459 = vmatpush1.bf16.msra.mxu0 %v437
    %460 = vmatprep.subr.bf16.mxu0 0
    %461 = vmatpush1.bf16.msra.mxu0 %v436
    %462 = vmatprep.subr.bf16.mxu0 0
    %463 = vmatpush1.bf16.msra.mxu0 %v435
    %464 = vmatprep.subr.bf16.mxu0 0
    %465 = vmatpush1.bf16.msra.mxu0 %v434
    %466 = vmatprep.subr.bf16.mxu0 0
    %467 = vmatpush2.bf16.msra.mxu0 0
    %468 = vmatprep.subr.bf16.mxu0 0
    %469 = vmatpush2.bf16.msra.mxu0 0
    %470 = vmatprep.subr.bf16.mxu0 0
    %471 = vmatpush2.bf16.msra.mxu0 0
    %472 = vmatprep.subr.bf16.mxu0 0
    %473 = vmatpush2.bf16.msra.mxu0 0
    %474 = vmatprep.subr.bf16.mxu0 0
    %475 = vmatpush2.bf16.msra.mxu0 0
    %476 = vmatprep.subr.bf16.mxu0 0
    %477 = vmatpush2.bf16.msra.mxu0 0
    %478 = vmatprep.subr.bf16.mxu0 0
    %479 = vmatpush2.bf16.msra.mxu0 0
    %480 = vmatprep.subr.bf16.mxu0 0
    %481 = vmatpush2.bf16.msra.mxu0 0
    %482 = vmatprep.mubr.bf16.mxu0 0
    %483 = vmatmul.mubr.bf16.gmra.mxu0 %v378
    %v484 = vpop.f32.mrf.mxu0
    %v485 = vadd.f32 %v400, %v484
    %v486 = vpop.f32.mrf.mxu0
    %v487 = vpop.f32.mrf.mxu0
    %v488 = vpop.f32.mrf.mxu0
    %489 = vdwg.mxu0
    %490 = vst [vmem:[%s7] sm:$0xff] %v485
    // Predicated region
    $region46: #{_lambda_.1} parent=1 // pred_check
      %p491 = pneg %p70
    $region47: #{_lambda_.1} parent=1 // pred_check_branch
      %493 = sbr.rel (%p491) target = $region49
    $region48: #{_lambda_.1} parent=1 // pred_region
      %v494 = vld [vmem:[#allocation2 + $0x8] sm:$0xff]
      %495 = vst [vmem:[%s8] sm:$0xff] %v494
    $region49: #{_lambda_.1} parent=1 // pred_fallthru
      _
    // Predicated region
    $region50: #{_lambda_.1} parent=1 // pred_check
      _
    $region51: #{_lambda_.1} parent=1 // pred_check_branch
      %497 = sbr.rel (0) target = $region53
    $region52: #{_lambda_.1} parent=1 // pred_region
      _
    $region53: #{_lambda_.1} parent=1 // pred_fallthru
      _
    // Predicated region
    $region54: #{_lambda_.1} parent=1 // pred_check
      _
    $region55: #{_lambda_.1} parent=1 // pred_check_branch
      %499 = sbr.rel (0) target = $region57
    $region56: #{_lambda_.1} parent=1 // pred_region
      _
    $region57: #{_lambda_.1} parent=1 // pred_fallthru
      _
    // Predicated region
    $region58: #{_lambda_.1} parent=1 // pred_check
      _
    $region59: #{_lambda_.1} parent=1 // pred_check_branch
      %501 = sbr.rel (0) target = $region61
    $region60: #{_lambda_.1} parent=1 // pred_region
      _
    $region61: #{_lambda_.1} parent=1 // pred_fallthru
      _
    // Predicated region
    $region62: #{_lambda_.1} parent=1 // pred_check
      _
    $region63: #{_lambda_.1} parent=1 // pred_check_branch
      %503 = sbr.rel (0) target = $region65
    $region64: #{_lambda_.1} parent=1 // pred_region
      _
    $region65: #{_lambda_.1} parent=1 // pred_fallthru
      _
    %504 = vsyncpa [#allocation6], 1
    %505 = vsyncpa [#allocation8], 1

</llo_original>
